<compile_context>
chip_gen: v5e
topology: v5e:2x2
jax: 0.10.0
libtpu: 0.0.40
codegen_flags: <defaults>
</compile_context>

<pallas_src>
import functools

import jax
import jax.numpy as jnp
from jax.experimental import pallas as pl
from jax.experimental.pallas import tpu as pltpu


# ----------------------------------------------------------------------------
# Generation-aware sizing helpers
# ----------------------------------------------------------------------------
def _round_up(x, m):
    return ((x + m - 1) // m) * m


@functools.lru_cache(maxsize=None)
def _budgets():
    """Return (vmem_limit_bytes, per_buffer_budget_bytes).

    128 MiB parts (v5e/v6e): big tiles; 64 MiB-per-TC parts (v7x): conservative.
    Falls back safely when hardware info is unavailable (e.g. interpret mode).
    """
    cap = None
    try:
        cap = int(pltpu.get_tpu_info().vmem_capacity_bytes)
    except Exception:
        cap = None
    if not cap or cap <= 0:
        cap = 64 * 1024 * 1024                      # conservative fallback (v7x per-TC)
    if cap >= 100 * 1024 * 1024:                    # v5e / v6e (128 MiB VMEM)
        return 96 * 1024 * 1024, 10 * 1024 * 1024
    return 40 * 1024 * 1024, 4 * 1024 * 1024        # v7x (64 MiB per TC)


_MAX_TILE_ROWS = 2048


def _sublane(dtype):
    # Row-tile rounding that matches sublane packing: f32 -> 8, bf16 -> 16, int8/fp8 -> 32.
    itemsize = jnp.dtype(dtype).itemsize
    return max(8, 32 // max(itemsize, 1))


def _pick_tile_rows(total_rows, row_bytes, dtype, max_rows=_MAX_TILE_ROWS):
    """Largest sublane-aligned row tile that fits the per-buffer VMEM budget."""
    _, per_buf = _budgets()
    sub = _sublane(dtype)
    t = max(sub, per_buf // max(row_bytes, 1))
    t = max(sub, (t // sub) * sub)
    t = min(t, max_rows)
    t = min(t, _round_up(max(total_rows, 1), sub))
    return t


# ----------------------------------------------------------------------------
# Portable in-kernel PRNG: counter-based uint32 hash over the global element
# index ("lowbias32"-style mixer).  Plain jnp ops -> works on TPU and in
# interpret mode (replaces pltpu.prng_* which has no CPU lowering).
# ----------------------------------------------------------------------------
def _uniform_bits(shape, row0, col0, num_cols, seed):
    rows = jax.lax.broadcasted_iota(jnp.int32, shape, 0) + row0
    cols = jax.lax.broadcasted_iota(jnp.int32, shape, 1) + col0
    # int32 wrap on huge tensors is fine: indices only feed a modular hash.
    idx = (rows * num_cols + cols).astype(jnp.uint32)
    s = seed.astype(jnp.uint32) * jnp.uint32(0x9E3779B9) + jnp.uint32(0x85EBCA6B)
    x = idx ^ s
    x = (x ^ (x >> 16)) * jnp.uint32(0x7FEB352D)
    x = (x ^ (x >> 15)) * jnp.uint32(0x846CA68B)
    return x ^ (x >> 16)


# ----------------------------------------------------------------------------
# LayerNorm math exactly as in the PyTorch module:
#   mean = x.mean(-1); std = x.std(-1)  (unbiased, /(N-1)); y = a*(x-mean)/(std+eps)+b
# One pass: sum(x) and sum(x*x) reductions can overlap on the XLU.
# ----------------------------------------------------------------------------
def _layernorm_f32(x, a, b, eps):
    n = x.shape[-1]
    s1 = jnp.sum(x, axis=-1, keepdims=True)
    s2 = jnp.sum(x * x, axis=-1, keepdims=True)
    mean = s1 * (1.0 / n)
    var = jnp.maximum((s2 - s1 * mean) * (1.0 / max(n - 1, 1)), 0.0)
    inv = 1.0 / (jnp.sqrt(var) + eps)        # eps added to std, torch-style
    return a * ((x - mean) * inv) + b


def _layernorm_kernel(x_ref, a_ref, b_ref, o_ref, *, eps):
    y = _layernorm_f32(x_ref[...].astype(jnp.float32),
                       a_ref[...].astype(jnp.float32),
                       b_ref[...].astype(jnp.float32), eps)
    o_ref[...] = y.astype(o_ref.dtype)


def layernorm_pallas(x2d, a2, b2, eps=1e-6):
    R, F = x2d.shape
    tile_rows = _pick_tile_rows(R, F * 4, x2d.dtype)   # f32 working set dominates
    vmem_limit, _ = _budgets()
    return pl.pallas_call(
        functools.partial(_layernorm_kernel, eps=eps),
        out_shape=jax.ShapeDtypeStruct((R, F), x2d.dtype),
        grid_spec=pltpu.PrefetchScalarGridSpec(
            num_scalar_prefetch=0,
            grid=(pl.cdiv(R, tile_rows),),             # ragged last block handled by Pallas
            in_specs=[
                pl.BlockSpec((tile_rows, F), lambda i: (i, 0)),
                pl.BlockSpec((1, F), lambda i: (0, 0)),
                pl.BlockSpec((1, F), lambda i: (0, 0)),
            ],
            out_specs=pl.BlockSpec((tile_rows, F), lambda i: (i, 0)),
        ),
        compiler_params=pltpu.CompilerParams(
            dimension_semantics=("parallel",),         # shards rows across TCs on v7x
            vmem_limit_bytes=vmem_limit),
    )(x2d, a2.reshape(1, F), b2.reshape(1, F))


# ----------------------------------------------------------------------------
# Residual add (eval path): out = x + s, in-place onto x's buffer.
# ----------------------------------------------------------------------------
def _residual_kernel(x_ref, s_ref, o_ref):
    o_ref[...] = x_ref[...] + s_ref[...]


def residual_pallas(x2d, s2d):
    R, F = x2d.shape
    itemsize = jnp.dtype(x2d.dtype).itemsize
    tile_rows = _pick_tile_rows(R, F * itemsize, x2d.dtype)
    vmem_limit, _ = _budgets()
    return pl.pallas_call(
        _residual_kernel,
        out_shape=jax.ShapeDtypeStruct((R, F), x2d.dtype),
        grid_spec=pltpu.PrefetchScalarGridSpec(
            num_scalar_prefetch=0,
            grid=(pl.cdiv(R, tile_rows),),
            in_specs=[pl.BlockSpec((tile_rows, F), lambda i: (i, 0)),
                      pl.BlockSpec((tile_rows, F), lambda i: (i, 0))],
            out_specs=pl.BlockSpec((tile_rows, F), lambda i: (i, 0)),
        ),
        # Aliases the real (un-padded) x view; becomes a true in-place update when
        # the caller donates x at its jit boundary.
        input_output_aliases={0: 0},
        compiler_params=pltpu.CompilerParams(
            dimension_semantics=("parallel",),
            vmem_limit_bytes=vmem_limit),
    )(x2d, s2d)


# ----------------------------------------------------------------------------
# Residual + inverted dropout (train path):
#   out = x + where(bits >= threshold, s / (1 - p), 0)
# ----------------------------------------------------------------------------
def _residual_dropout_kernel(seed_ref, x_ref, s_ref, o_ref, *,
                             threshold, scale, tile_rows, num_cols):
    row0 = pl.program_id(0) * tile_rows
    bits = _uniform_bits(x_ref.shape, row0, 0, num_cols, seed_ref[0])
    keep = bits >= jnp.uint32(threshold)
    x = x_ref[...].astype(jnp.float32)
    s = s_ref[...].astype(jnp.float32)
    o_ref[...] = (x + jnp.where(keep, s * jnp.float32(scale),
                                jnp.float32(0.0))).astype(o_ref.dtype)


def residual_dropout_pallas(x2d, s2d, rate, seed):
    R, F = x2d.shape
    tile_rows = _pick_tile_rows(R, F * 4, x2d.dtype)
    vmem_limit, _ = _budgets()
    threshold = min(int(rate * (1 << 32)), (1 << 32) - 1)
    scale = 1.0 / (1.0 - rate)
    seed_arr = jnp.asarray(seed, dtype=jnp.int32).reshape(1)
    # TODO(synk): input_output_aliases skipped here -- operand-index semantics under
    # scalar prefetch are ambiguous; add once verified for this jax version.
    return pl.pallas_call(
        functools.partial(_residual_dropout_kernel, threshold=threshold,
                          scale=scale, tile_rows=tile_rows, num_cols=F),
        out_shape=jax.ShapeDtypeStruct((R, F), x2d.dtype),
        grid_spec=pltpu.PrefetchScalarGridSpec(
            num_scalar_prefetch=1,
            grid=(pl.cdiv(R, tile_rows),),
            in_specs=[pl.BlockSpec((tile_rows, F), lambda i, seed: (i, 0)),
                      pl.BlockSpec((tile_rows, F), lambda i, seed: (i, 0))],
            out_specs=pl.BlockSpec((tile_rows, F), lambda i, seed: (i, 0)),
        ),
        compiler_params=pltpu.CompilerParams(
            dimension_semantics=("parallel",),   # mask depends only on global index
            vmem_limit_bytes=vmem_limit),
    )(seed_arr, x2d, s2d)


# ----------------------------------------------------------------------------
# Fully fused path for the common dense sublayer (sublayer(y) = y @ W + bias):
#   LayerNorm prologue -> matmul on the MXU -> residual(+dropout) epilogue,
# all in one kernel: one HBM pass over x / W / out (no `normed` or `s` round trip).
# ----------------------------------------------------------------------------
def _fused_dense_kernel(seed_ref, x_ref, w_ref, bias_ref, a_ref, b_ref, o_ref, *,
                        eps, tile_rows, tile_cols, num_cols,
                        apply_dropout, threshold, scale):
    i = pl.program_id(0)
    j = pl.program_id(1)
    x = x_ref[...].astype(jnp.float32)                       # (tm, F): full feature axis for LN
    normed = _layernorm_f32(x, a_ref[...].astype(jnp.float32),
                            b_ref[...].astype(jnp.float32), eps)
    acc = jnp.dot(normed.astype(w_ref.dtype), w_ref[...],
                  preferred_element_type=jnp.float32)        # (tm, tn) on the MXU
    acc = acc + bias_ref[...].astype(jnp.float32)
    if apply_dropout:
        bits = _uniform_bits(acc.shape, i * tile_rows, j * tile_cols,
                             num_cols, seed_ref[0])
        acc = jnp.where(bits >= jnp.uint32(threshold),
                        acc * jnp.float32(scale), jnp.float32(0.0))
    # residual uses the matching column slice of the already-resident x block
    x_res = x_ref[:, pl.ds(j * tile_cols, tile_cols)].astype(jnp.float32)
    o_ref[...] = (x_res + acc).astype(o_ref.dtype)


def sublayer_connection_dense(x, a2, b2, W, bias, *, dropout_rate=0.1,
                              training=False, seed=0, eps=1e-6):
    """SublayerConnection with a dense sublayer fused into a single Pallas kernel."""
    B, S, F = x.shape
    R = B * S
    x2d = x.reshape(R, F)
    vmem_limit, per_buf = _budgets()
    # Column tile: full F when not 128-aligned, else a budget-sized multiple of 128.
    if F % 128 == 0:
        tn = max(128, ((per_buf // max(F * 4, 1)) // 128) * 128)
        tn = min(min(tn, 512), F)
    else:
        tn = F
    # TODO(synk): K (feature) axis is kept whole inside the block (needed for LN);
    # for very large F add a K-tiled variant with a VMEM accumulator.
    tm = _pick_tile_rows(R, F * 4, x.dtype, max_rows=512)
    apply_dropout = bool(training and dropout_rate > 0.0)
    threshold = min(int(dropout_rate * (1 << 32)), (1 << 32) - 1)
    scale = 1.0 / (1.0 - dropout_rate) if dropout_rate < 1.0 else 0.0
    seed_arr = jnp.asarray(seed, dtype=jnp.int32).reshape(1)
    out2d = pl.pallas_call(
        functools.partial(_fused_dense_kernel, eps=eps, tile_rows=tm,
                          tile_cols=tn, num_cols=F, apply_dropout=apply_dropout,
                          threshold=threshold, scale=scale),
        out_shape=jax.ShapeDtypeStruct((R, F), x.dtype),
        grid_spec=pltpu.PrefetchScalarGridSpec(
            num_scalar_prefetch=1,
            grid=(pl.cdiv(R, tm), pl.cdiv(F, tn)),
            in_specs=[
                pl.BlockSpec((tm, F), lambda i, j, seed: (i, 0)),   # x (full F for LN + residual)
                pl.BlockSpec((F, tn), lambda i, j, seed: (0, j)),   # W
                pl.BlockSpec((1, tn), lambda i, j, seed: (0, j)),   # bias
                pl.BlockSpec((1, F), lambda i, j, seed: (0, 0)),    # a_2
                pl.BlockSpec((1, F), lambda i, j, seed: (0, 0)),    # b_2
            ],
            out_specs=pl.BlockSpec((tm, tn), lambda i, j, seed: (i, j)),
        ),
        compiler_params=pltpu.CompilerParams(
            dimension_semantics=("parallel", "parallel"),
            vmem_limit_bytes=vmem_limit),
    )(seed_arr, x2d, W, bias.reshape(1, F), a2.reshape(1, F), b2.reshape(1, F))
    return out2d.reshape(B, S, F)


# ----------------------------------------------------------------------------
# Generic SublayerConnection forward: x + dropout(sublayer(norm(x))) for an
# arbitrary JAX `sublayer` callable (cannot be fused -> 3 HBM passes).
# ----------------------------------------------------------------------------
def sublayer_connection(x, a2, b2, sublayer, *, dropout_rate=0.1,
                        training=False, seed=0, eps=1e-6):
    B, S, F = x.shape
    x2d = x.reshape(B * S, F)
    normed = layernorm_pallas(x2d, a2, b2, eps=eps).reshape(B, S, F)
    s2d = sublayer(normed).reshape(B * S, F)       # arbitrary user sublayer (plain JAX glue)
    if training and dropout_rate > 0.0:
        out2d = residual_dropout_pallas(x2d, s2d, dropout_rate, seed)
    else:
        out2d = residual_pallas(x2d, s2d)
    return out2d.reshape(B, S, F)


# ----------------------------------------------------------------------------
# Pure-JAX reference (eval path) for correctness checking.
# ----------------------------------------------------------------------------
def _reference(x, a2, b2, sublayer, eps=1e-6):
    mean = jnp.mean(x, axis=-1, keepdims=True)
    var = jnp.sum((x - mean) ** 2, axis=-1, keepdims=True) / (x.shape[-1] - 1)
    normed = a2 * (x - mean) / (jnp.sqrt(var) + eps) + b2
    return x + sublayer(normed)


if __name__ == "__main__":
    key = jax.random.PRNGKey(0)
    B, S, F = 2, 8, 32
    k_x, k_w, k_b = jax.random.split(key, 3)

    x = jax.random.normal(k_x, (B, S, F), dtype=jnp.float32)
    a2 = jnp.ones((F,), dtype=jnp.float32)    # self.a_2
    b2 = jnp.zeros((F,), dtype=jnp.float32)   # self.b_2

    # Example dense sublayer (the module takes the sublayer as a callable argument).
    W = jax.random.normal(k_w, (F, F), dtype=jnp.float32) * 0.02
    bias = jax.random.normal(k_b, (F,), dtype=jnp.float32) * 0.02
    sublayer = lambda y: jnp.einsum("bsf,fg->bsg", y, W) + bias

    ref = _reference(x, a2, b2, sublayer)

    # 1) Generic path (arbitrary sublayer), eval mode: tight correctness check.
    out_eval = jax.block_until_ready(
        sublayer_connection(x, a2, b2, sublayer, dropout_rate=0.1, training=False))
    assert out_eval.shape == (B, S, F)
    assert jnp.allclose(out_eval, ref, rtol=1e-5, atol=1e-5)

    # 2) Fully fused LN + dense + residual single-kernel path, eval mode.
    out_fused = jax.block_until_ready(
        sublayer_connection_dense(x, a2, b2, W, bias, dropout_rate=0.1, training=False))
    assert out_fused.shape == (B, S, F)
    assert jnp.allclose(out_fused, ref, rtol=2e-3, atol=2e-3)

    # 3) Training mode (inverted dropout via in-kernel counter hash) — sanity checks.
    out_train = jax.block_until_ready(
        sublayer_connection(x, a2, b2, sublayer, dropout_rate=0.1,
                            training=True, seed=123))
    assert out_train.shape == (B, S, F)
    assert bool(jnp.all(jnp.isfinite(out_train)))
    drop_frac = float(jnp.mean((out_train == x).astype(jnp.float32)))
    assert 0.005 < drop_frac < 0.35, drop_frac   # expected ~0.1

    out_train_fused = jax.block_until_ready(
        sublayer_connection_dense(x, a2, b2, W, bias, dropout_rate=0.1,
                                  training=True, seed=123))
    assert bool(jnp.all(jnp.isfinite(out_train_fused)))

    print("KERNEL_OK")
</pallas_src>

<mosaic_0001>
module attributes {stable_mosaic.version = 11 : i64} {
  func.func @_layernorm_kernel(%arg0: i32, %arg1: memref<16x32xf32, #tpu.memory_space<vmem>>, %arg2: memref<1x32xf32, #tpu.memory_space<vmem>>, %arg3: memref<1x32xf32, #tpu.memory_space<vmem>>, %arg4: memref<16x32xf32, #tpu.memory_space<vmem>>) attributes {dimension_semantics = [#tpu.dimension_semantics<parallel>], iteration_bounds = array<i64: 1>, scalar_prefetch = 0 : i64, scratch_operands = 0 : i64, tpu.core_type = #tpu.core_type<tc>, window_params = [{transform_indices = @transform_0, window_bounds = array<i64: 16, 32>}, {pipeline_mode = #tpu.pipeline_mode<synchronous>, transform_indices = @transform_1, window_bounds = array<i64: 1, 32>}, {pipeline_mode = #tpu.pipeline_mode<synchronous>, transform_indices = @transform_2, window_bounds = array<i64: 1, 32>}, {transform_indices = @transform_3, window_bounds = array<i64: 16, 32>}]} {
    %c0 = arith.constant 0 : index
    %c0_0 = arith.constant 0 : index
    %0 = vector.load %arg1[%c0, %c0_0] : memref<16x32xf32, #tpu.memory_space<vmem>>, vector<16x32xf32>
    %c0_1 = arith.constant 0 : index
    %c0_2 = arith.constant 0 : index
    %1 = vector.load %arg2[%c0_1, %c0_2] : memref<1x32xf32, #tpu.memory_space<vmem>>, vector<1x32xf32>
    %c0_3 = arith.constant 0 : index
    %c0_4 = arith.constant 0 : index
    %2 = vector.load %arg3[%c0_3, %c0_4] : memref<1x32xf32, #tpu.memory_space<vmem>>, vector<1x32xf32>
    %cst = arith.constant dense<0.000000e+00> : vector<16xf32>
    %3 = vector.multi_reduction <add>, %0, %cst [1] : vector<16x32xf32> to vector<16xf32>
    %4 = vector.shape_cast %3 : vector<16xf32> to vector<16x1xf32>
    %5 = arith.mulf %0, %0 : vector<16x32xf32>
    %cst_5 = arith.constant dense<0.000000e+00> : vector<16xf32>
    %6 = vector.multi_reduction <add>, %5, %cst_5 [1] : vector<16x32xf32> to vector<16xf32>
    %7 = vector.shape_cast %6 : vector<16xf32> to vector<16x1xf32>
    %cst_6 = arith.constant 3.125000e-02 : f32
    %8 = vector.broadcast %cst_6 : f32 to vector<16x1xf32>
    %9 = arith.mulf %4, %8 : vector<16x1xf32>
    %10 = arith.mulf %4, %9 : vector<16x1xf32>
    %11 = arith.subf %7, %10 : vector<16x1xf32>
    %cst_7 = arith.constant 0.0322580636 : f32
    %12 = vector.broadcast %cst_7 : f32 to vector<16x1xf32>
    %13 = arith.mulf %11, %12 : vector<16x1xf32>
    %cst_8 = arith.constant 0.000000e+00 : f32
    %14 = vector.broadcast %cst_8 : f32 to vector<16x1xf32>
    %15 = arith.maximumf %13, %14 : vector<16x1xf32>
    %16 = math.sqrt %15 : vector<16x1xf32>
    %cst_9 = arith.constant 9.99999997E-7 : f32
    %17 = vector.broadcast %cst_9 : f32 to vector<16x1xf32>
    %18 = arith.addf %16, %17 : vector<16x1xf32>
    %cst_10 = arith.constant 1.000000e+00 : f32
    %19 = vector.broadcast %cst_10 : f32 to vector<16x1xf32>
    %20 = arith.divf %19, %18 : vector<16x1xf32>
    %21 = vector.broadcast %9 : vector<16x1xf32> to vector<16x32xf32>
    %22 = arith.subf %0, %21 : vector<16x32xf32>
    %23 = vector.broadcast %20 : vector<16x1xf32> to vector<16x32xf32>
    %24 = arith.mulf %22, %23 : vector<16x32xf32>
    %25 = vector.broadcast %1 : vector<1x32xf32> to vector<16x32xf32>
    %26 = arith.mulf %25, %24 : vector<16x32xf32>
    %27 = vector.broadcast %2 : vector<1x32xf32> to vector<16x32xf32>
    %28 = arith.addf %26, %27 : vector<16x32xf32>
    %c0_11 = arith.constant 0 : index
    %c0_12 = arith.constant 0 : index
    %29 = vector.load %arg4[%c0_11, %c0_12] : memref<16x32xf32, #tpu.memory_space<vmem>>, vector<16x32xf32>
    tpu.vector_store %arg4[%c0_11, %c0_12], %28 {strides = array<i32>} : memref<16x32xf32, #tpu.memory_space<vmem>>, vector<16x32xf32>,
    return
  }
  func.func @transform_0(%arg0: i32) -> (i32, i32) {
    %c0_i32 = arith.constant 0 : i32
    %c0_i32_0 = arith.constant 0 : i32
    return %arg0, %c0_i32 : i32, i32
  }
  func.func @transform_1(%arg0: i32) -> (i32, i32) {
    %c0_i32 = arith.constant 0 : i32
    %c0_i32_0 = arith.constant 0 : i32
    %c0_i32_1 = arith.constant 0 : i32
    return %c0_i32, %c0_i32_0 : i32, i32
  }
  func.func @transform_2(%arg0: i32) -> (i32, i32) {
    %c0_i32 = arith.constant 0 : i32
    %c0_i32_0 = arith.constant 0 : i32
    %c0_i32_1 = arith.constant 0 : i32
    return %c0_i32, %c0_i32_0 : i32, i32
  }
  func.func @transform_3(%arg0: i32) -> (i32, i32) {
    %c0_i32 = arith.constant 0 : i32
    %c0_i32_0 = arith.constant 0 : i32
    return %arg0, %c0_i32 : i32, i32
  }
}

</mosaic_0001>

<llo_original>
// kernel: tpu_custom_call.1
$region0: #{tpu_custom_call.1}
  #allocation0 [shape = 'u32[]', space=smem, size = 0x4, offset = 0x4, fixed_abs, tag = 'smem constant byte address 0x4 - core index']
  #allocation1 [shape = 'u32[72,128]{1,0:T(1,128)}', space=vmem, size = 0x9000, scoped, tag = 'internal scratch']
  %s0 = inlined_call_operand.hbm [shape: f32[16,32], index: 0, kind: input, shape index: {}]
  %s1 = inlined_call_operand.hbm [shape: f32[1,32], index: 1, kind: input, shape index: {}]
  %s2 = inlined_call_operand.vmem [shape: f32[1,32], index: 2, kind: input, shape index: {}]
  %s3 = inlined_call_operand.hbm [shape: f32[16,32], index: 3, kind: output, shape index: {}]
  %s4 = sld [smem:[#allocation0]]
  $region30: #{tpu_custom_call.1} parent=0
    _
  %s6 = ssub.s32 1, %s4
  %s7 = scalar_select 0, %s6, %s4
  $region1: #{tpu_custom_call.1} parent=0
    #allocation2 [shape = 'u8[8192]{0}', space=vmem, size = 0x2000, scoped, tag = 'input window, operand 0, single buffered']
    #allocation3 [shape = 's32[1]{0}', space=sflag, size = 0x4, scoped, tag = 'scoped memory for tpu_custom_call.1']
    #allocation4 [shape = 's32[1]{0}', space=sflag, size = 0x4, scoped, tag = 'scoped memory for tpu_custom_call.1']
    #allocation5 [shape = 'u8[512]{0}', space=vmem, size = 0x400, scoped, tag = 'input window, operand 1, single buffered']
    #allocation6 [shape = 's32[1]{0}', space=sflag, size = 0x4, scoped, tag = 'scoped memory for tpu_custom_call.1']
    #allocation7 [shape = 'u8[8192]{0}', space=vmem, size = 0x2000, scoped, tag = 'output window, operand 0, single buffered']
    %8 = vsyncpa [#allocation3], 0
    %9 = vsyncpa [#allocation6], 0
    %10 = vsyncpa [#allocation4], 0
    // Predicated region
    $region2: #{tpu_custom_call.1} parent=1 // pred_check
      _
    $region3: #{tpu_custom_call.1} parent=1 // pred_check_branch
      %12 = sbr.rel (0) target = $region5
    $region4: #{tpu_custom_call.1} parent=1 // pred_region
      %14 = vsyncadd [#allocation3], 0
      %s15 = sshll.u32 %s0, 4
      %s16 = int_to_ptr.hbm [resolvable:$true] %s15
      %s17 = sshll.u32 [#allocation2], 4
      %s18 = int_to_ptr.vmem [resolvable:$true] %s17
      %23 = dma.hbm_to_vmem [thread:$0]  %s16, 256, %s18, [#allocation3], 128, 128, 8
    $region5: #{tpu_custom_call.1} parent=1 // pred_fallthru
      _
    // Predicated region
    $region6: #{tpu_custom_call.1} parent=1 // pred_check
      _
    $region7: #{tpu_custom_call.1} parent=1 // pred_check_branch
      %25 = sbr.rel (0) target = $region9
    $region8: #{tpu_custom_call.1} parent=1 // pred_region
      %27 = vsyncadd [#allocation6], 0
      %s29 = sshll.u32 %s1, 4
      %s30 = int_to_ptr.hbm [resolvable:$true] %s29
      %s31 = sshll.u32 [#allocation5], 4
      %s32 = int_to_ptr.vmem [resolvable:$true] %s31
      %34 = dma.hbm_to_vmem [thread:$0]  %s30, 16, %s32, [#allocation6]
    $region9: #{tpu_custom_call.1} parent=1 // pred_fallthru
      _
    // Predicated region
    $region10: #{tpu_custom_call.1} parent=1 // pred_check
      _
    $region11: #{tpu_custom_call.1} parent=1 // pred_check_branch
      %36 = sbr.rel (0) target = $region13
    $region12: #{tpu_custom_call.1} parent=1 // pred_region
      _
    $region13: #{tpu_custom_call.1} parent=1 // pred_fallthru
      _
    // Predicated region
    $region14: #{tpu_custom_call.1} parent=1 // pred_check
      _
    $region15: #{tpu_custom_call.1} parent=1 // pred_check_branch
      %38 = sbr.rel (0) target = $region17
    $region16: #{tpu_custom_call.1} parent=1 // pred_region
      %40 = dma.done [#allocation3], 256
    $region17: #{tpu_custom_call.1} parent=1 // pred_fallthru
      _
    // Predicated region
    $region18: #{tpu_custom_call.1} parent=1 // pred_check
      _
    $region19: #{tpu_custom_call.1} parent=1 // pred_check_branch
      %42 = sbr.rel (0) target = $region21
    $region20: #{tpu_custom_call.1} parent=1 // pred_region
      %44 = dma.done [#allocation6], 16
    $region21: #{tpu_custom_call.1} parent=1 // pred_fallthru
      _
    %v45 = vld [vmem:[#allocation2] sm:$0xff]
    %v46 = vld [vmem:[#allocation2 + $0x8] sm:$0xff]
    %v47 = vld [vmem:[#allocation5] sm:$0x1]
    %v48 = vld [vmem:[%s2] sm:$0x1]
    %vm49 = vcmask 261120
    %v50 = vsel %vm49, %v45, 0.0
    %51 = vadd.xlane.f32.xlu0 %v50
    %v52 = vpop.xlane.xlu0 %51
    %v53 = vsel %vm49, %v46, 0.0
    %54 = vadd.xlane.f32.xlu0 %v53
    %v55 = vpop.xlane.xlu0 %54
    %v56 = vmul.f32 %v45, %v45
    %v57 = vmul.f32 %v46, %v46
    %v58 = vsel %vm49, %v56, 0.0
    %59 = vadd.xlane.f32.xlu0 %v58
    %v60 = vpop.xlane.xlu0 %59
    %v61 = vsel %vm49, %v57, 0.0
    %62 = vadd.xlane.f32.xlu0 %v61
    %v63 = vpop.xlane.xlu0 %62
    %v64 = vmul.f32 %v52, 0.03125
    %v65 = vmul.f32 %v55, 0.03125
    %v66 = vmul.f32 %v52, %v64
    %v67 = vmul.f32 %v55, %v65
    %v68 = vsub.f32 %v60, %v66
    %v69 = vsub.f32 %v63, %v67
    %v70 = vmul.f32 %v68, 0.032258064
    %v71 = vmul.f32 %v69, 0.032258064
    %v72 = vmax.f32 %v70, 0.0
    %v73 = vmax.f32 %v71, 0.0
    %v74 = vrsqrt.pop %v72
    %v75 = vmul.f32 %v74, %v72
    %v76 = vmul.f32 %v75, %v74
    %v77 = vmul.f32 0.5, %v76
    %v78 = vsub.f32 1.5, %v77
    %v79 = vmul.f32 %v74, %v78
    %v80 = vmul.f32 %v72, %v79
    %vm81 = vcmp.eq.f32.partialorder %v72, inf
    %v82 = vsel %vm81, %v72, %v80
    %vm83 = vcmp.eq.f32.partialorder %v72, 0.0
    %v84 = vand.u32 %v72, 2147483648
    %v85 = vsel %vm83, %v84, %v82
    %v86 = vrsqrt.pop %v73
    %v87 = vmul.f32 %v86, %v73
    %v88 = vmul.f32 %v87, %v86
    %v89 = vmul.f32 0.5, %v88
    %v90 = vsub.f32 1.5, %v89
    %v91 = vmul.f32 %v86, %v90
    %v92 = vmul.f32 %v73, %v91
    %vm93 = vcmp.eq.f32.partialorder %v73, inf
    %v94 = vsel %vm93, %v73, %v92
    %vm95 = vcmp.eq.f32.partialorder %v73, 0.0
    %v96 = vand.u32 %v73, 2147483648
    %v97 = vsel %vm95, %v96, %v94
    %v98 = vadd.f32 %v85, 1e-06
    %v99 = vadd.f32 %v97, 1e-06
    %v100 = vrcp.pop %v98
    %v101 = vmul.f32 %v98, %v100
    %v102 = vsub.f32 1.0, %v101
    %v103 = vmul.f32 %v100, %v102
    %v104 = vadd.f32 %v100, %v103
    %vm105 = vweird.f32 %v98
    %vm106 = vweird.f32 %v100
    %vm107 = vmor %vm105, %vm106
    %v108 = vsel %vm107, %v100, %v104
    %v109 = vand.u32 2147483647, %v98
    %vm110 = vcmp.eq.f32.partialorder %v109, 8.507059e+37
    %v111 = vand.u32 %v98, 2147483648
    %v112 = vor.u32 1.1754944e-38, %v111
    %v113 = vsel %vm110, %v112, %v108
    %v114 = vmul.f32 1.0, %v113
    %v115 = vrcp.pop %v99
    %v116 = vmul.f32 %v99, %v115
    %v117 = vsub.f32 1.0, %v116
    %v118 = vmul.f32 %v115, %v117
    %v119 = vadd.f32 %v115, %v118
    %vm120 = vweird.f32 %v99
    %vm121 = vweird.f32 %v115
    %vm122 = vmor %vm120, %vm121
    %v123 = vsel %vm122, %v115, %v119
    %v124 = vand.u32 2147483647, %v99
    %vm125 = vcmp.eq.f32.partialorder %v124, 8.507059e+37
    %v126 = vand.u32 %v99, 2147483648
    %v127 = vor.u32 1.1754944e-38, %v126
    %v128 = vsel %vm125, %v127, %v123
    %v129 = vmul.f32 1.0, %v128
    %v130 = vsub.f32 %v45, %v64
    %v131 = vsub.f32 %v46, %v65
    %v132 = vmul.f32 %v130, %v114
    %v133 = vmul.f32 %v131, %v129
    %v135 = vperm.slane %v47, 0
    %v137 = vmul.f32 %v135, %v132
    %v138 = vmul.f32 %v135, %v133
    %v140 = vperm.slane %v48, 0
    %v142 = vadd.f32 %v137, %v140
    %v143 = vadd.f32 %v138, %v140
    %144 = vst.msk [vmem:[#allocation7] sm:$0xff] %vm49, %v142
    %145 = vst.msk [vmem:[#allocation7 + $0x8] sm:$0xff] %vm49, %v143
    // Predicated region
    $region22: #{tpu_custom_call.1} parent=1 // pred_check
      _
    $region23: #{tpu_custom_call.1} parent=1 // pred_check_branch
      %147 = sbr.rel (0) target = $region25
    $region24: #{tpu_custom_call.1} parent=1 // pred_region
      %149 = vsyncadd [#allocation4], 0
      %s150 = sshll.u32 [#allocation7], 4
      %s151 = int_to_ptr.vmem [resolvable:$true] %s150
      %s152 = sshll.u32 %s3, 4
      %s153 = int_to_ptr.hbm [resolvable:$true] %s152
      %158 = dma.vmem_to_hbm [thread:$0]  %s151, 256, %s153, [#allocation4], 128, 128, 8
    $region25: #{tpu_custom_call.1} parent=1 // pred_fallthru
      _
    // Predicated region
    $region26: #{tpu_custom_call.1} parent=1 // pred_check
      _
    $region27: #{tpu_custom_call.1} parent=1 // pred_check_branch
      %160 = sbr.rel (0) target = $region29
    $region28: #{tpu_custom_call.1} parent=1 // pred_region
      %162 = dma.done [#allocation4], 256
    $region29: #{tpu_custom_call.1} parent=1 // pred_fallthru
      _
    %163 = vsyncpa [#allocation3], 1
    %164 = vsyncpa [#allocation6], 1
    %165 = vsyncpa [#allocation4], 1

</llo_original>
